<compile_context>
chip_gen: v7x
topology: tpu7x:2x2x1
jax: 0.10.0
libtpu: 0.0.40
codegen_flags: <defaults>
</compile_context>

<pallas_src>
import jax
import jax.numpy as jnp
from jax.experimental import pallas as pl
from jax.experimental.pallas import tpu as pltpu

BDSize = 5
numOfClasses = 10
nz = 100
OUT_DIM = 3 * BDSize * BDSize       # 75
LANE = 128


def hidden_net_kernel(c_ref, x_ref, wc_ref, wx_ref, w23_ref, b_ref, out_ref):
    """Fused forward:
         h   = ReLU(c @ Wc + x @ Wx + b1)     (fc0 / fc1 / fc11 collapsed)
         out = sigmoid(h @ W23 + b23)         (fc2 / fc3 collapsed)
       c_ref  : (TB, 10)   f32        x_ref  : (TB, 100)  f32
       wc_ref : (10, 128)  bf16       wx_ref : (100, 128) bf16
       w23_ref: (128, 128) bf16 (cols >= 75 zero)
       b_ref  : (8, 128)   f32  (row 0 = stage-1 bias, row 1 = stage-2 bias)
       out_ref: (TB, 128)  bf16 (cols >= 75 are padding, value 0.5)."""
    b1 = b_ref[0:1, :]                                       # (1, 128) f32
    b2 = b_ref[1:2, :]                                       # (1, 128) f32

    # stage 1 (bias added exactly in f32)
    h = (jnp.dot(c_ref[...].astype(jnp.bfloat16), wc_ref[...],
                 preferred_element_type=jnp.float32)
         + jnp.dot(x_ref[...].astype(jnp.bfloat16), wx_ref[...],
                   preferred_element_type=jnp.float32)
         + b1)
    h = jnp.maximum(h, 0.0)
    # TODO(synk): nn.Dropout(0.5) is identity at inference; training-mode masks not implemented.

    # stage 2
    logits = jnp.dot(h.astype(jnp.bfloat16), w23_ref[...],
                     preferred_element_type=jnp.float32) + b2
    out_ref[...] = jax.nn.sigmoid(logits).astype(out_ref.dtype)


def prepare_params(params):
    """One-time weight fusion (call ONCE at weight-load time, not per forward call)."""
    w0, b0, w1, b1, w11, b11, w2, b2, w3, b3 = params
    wc = (w0 @ w11[:64, :]).astype(jnp.bfloat16)                       # (10, 128)
    wx = (w1 @ w11[64:, :]).astype(jnp.bfloat16)                       # (100, 128)
    b_stage1 = b0 @ w11[:64, :] + b1 @ w11[64:, :] + b11               # (128,) f32
    w23 = jnp.pad(w2 @ w3, ((0, 0), (0, LANE - OUT_DIM))).astype(jnp.bfloat16)  # (128,128)
    b_stage2 = jnp.pad(b2 @ w3 + b3, (0, LANE - OUT_DIM))              # (128,) f32
    biases = jnp.zeros((8, LANE), jnp.float32)
    biases = biases.at[0].set(b_stage1).at[1].set(b_stage2)            # (8, 128)
    return wc, wx, w23, biases


def _choose_tile(B, batch_tile):
    # v7x megacore: keep >= ~8 grid steps (>= 4 per TensorCore) so both cores
    # overlap prefetch and compute; never drop below a 128-row tile.
    tile = batch_tile
    while tile > 128 and pl.cdiv(B, tile) < 8:
        tile //= 2
    return tile


def hidden_net_forward(c, x, prepared, *, batch_tile=1024, small_batch_cutoff=1024):
    """Returns (B, 128) bf16 sigmoid outputs; columns >= OUT_DIM (75) are padding
    (value 0.5) — slice/fuse in the consumer."""
    wc, wx, w23, biases = prepared
    B = c.shape[0]
    vmem = pltpu.MemorySpace.VMEM
    out_dtype = jnp.bfloat16

    if B <= small_batch_cutoff:
        # Tiny/medium batch: grid-less, whole arrays resident in VMEM.
        return pl.pallas_call(
            hidden_net_kernel,
            out_shape=jax.ShapeDtypeStruct((B, LANE), out_dtype),
            in_specs=[pl.BlockSpec(memory_space=vmem)] * 6,
            out_specs=pl.BlockSpec(memory_space=vmem),
        )(c, x, wc, wx, w23, biases)

    # Batch-tiled path: weights resident (constant index_map -> copied once; a
    # Buffered(1) hint is skipped for compatibility, the extra buffer is ~60 KiB),
    # batch axis "parallel" (shards across TensorCores on v7x). Ragged batches are
    # zero-padded to a tile multiple and trimmed afterwards.
    tile = _choose_tile(B, batch_tile)
    n_tiles = pl.cdiv(B, tile)
    Bp = n_tiles * tile
    if Bp != B:
        c = jnp.pad(c, ((0, Bp - B), (0, 0)))
        x = jnp.pad(x, ((0, Bp - B), (0, 0)))

    out = pl.pallas_call(
        hidden_net_kernel,
        out_shape=jax.ShapeDtypeStruct((Bp, LANE), out_dtype),
        grid=(n_tiles,),
        in_specs=[
            pl.BlockSpec((tile, numOfClasses), lambda i: (i, 0)),
            pl.BlockSpec((tile, nz), lambda i: (i, 0)),
            pl.BlockSpec((numOfClasses, LANE), lambda i: (0, 0)),
            pl.BlockSpec((nz, LANE), lambda i: (0, 0)),
            pl.BlockSpec((LANE, LANE), lambda i: (0, 0)),
            pl.BlockSpec((8, LANE), lambda i: (0, 0)),
        ],
        out_specs=pl.BlockSpec((tile, LANE), lambda i: (i, 0)),
        compiler_params=pltpu.CompilerParams(
            dimension_semantics=("parallel",)),
    )(c, x, wc, wx, w23, biases)

    return out[:B] if Bp != B else out


def init_params(key):
    """Deterministic init matching PyTorch nn.Linear shapes.
    Weights are stored transposed: (in_features, out_features)."""
    def linear(key, fan_in, fan_out):
        kw, kb = jax.random.split(key)
        bound = 1.0 / jnp.sqrt(fan_in)
        w = jax.random.uniform(kw, (fan_in, fan_out), jnp.float32, -bound, bound)
        b = jax.random.uniform(kb, (fan_out,), jnp.float32, -bound, bound)
        return w, b

    keys = jax.random.split(key, 5)
    w0, b0 = linear(keys[0], numOfClasses, 64)   # fc0
    w1, b1 = linear(keys[1], nz, 64)             # fc1
    w11, b11 = linear(keys[2], 128, 128)         # fc11
    w2, b2 = linear(keys[3], 128, 128)           # fc2
    w3, b3 = linear(keys[4], 128, OUT_DIM)       # fc3
    return (w0, b0, w1, b1, w11, b11, w2, b2, w3, b3)


def reference_forward(c, x, params):
    """Pure-JAX f32 reference matching the PyTorch module (eval mode)."""
    w0, b0, w1, b1, w11, b11, w2, b2, w3, b3 = params
    xc = c @ w0 + b0
    xx = x @ w1 + b1
    gen_input = jnp.concatenate((xc, xx), axis=-1)
    h = jnp.maximum(gen_input @ w11 + b11, 0.0)
    h = h @ w2 + b2
    h = h @ w3 + b3
    return jax.nn.sigmoid(h)


if __name__ == "__main__":
    key = jax.random.PRNGKey(0)
    kp, kc, kx = jax.random.split(key, 3)

    params = init_params(kp)
    prepared = prepare_params(params)   # one-time fusion, hoisted out of the call path

    # Small batch -> grid-less path.
    B = 8
    c = jax.random.normal(kc, (B, numOfClasses), jnp.float32)
    x = jax.random.normal(kx, (B, nz), jnp.float32)
    out = jax.block_until_ready(hidden_net_forward(c, x, prepared))
    ref = reference_forward(c, x, params)
    assert out.shape == (B, LANE)
    err = float(jnp.max(jnp.abs(out[:, :OUT_DIM].astype(jnp.float32) - ref)))
    assert err < 2.5e-2, f"max abs err {err}"   # bf16 fused weights + bf16 output

    # Ragged larger batch -> batch-tiled grid path (resident weights, parallel axis,
    # zero-padded last tile trimmed afterwards).
    B2 = 200
    c2 = jax.random.normal(kc, (B2, numOfClasses), jnp.float32)
    x2 = jax.random.normal(kx, (B2, nz), jnp.float32)
    out2 = jax.block_until_ready(
        hidden_net_forward(c2, x2, prepared, batch_tile=64, small_batch_cutoff=64))
    ref2 = reference_forward(c2, x2, params)
    assert out2.shape == (B2, LANE)
    err2 = float(jnp.max(jnp.abs(out2[:, :OUT_DIM].astype(jnp.float32) - ref2)))
    assert err2 < 2.5e-2, f"max abs err {err2}"

    print("KERNEL_OK")
</pallas_src>

<mosaic_0001>
module attributes {stable_mosaic.version = 11 : i64} {
  func.func @hidden_net_kernel(%arg0: memref<8x10xf32, #tpu.memory_space<vmem>>, %arg1: memref<8x100xf32, #tpu.memory_space<vmem>>, %arg2: memref<10x128xbf16, #tpu.memory_space<vmem>>, %arg3: memref<100x128xbf16, #tpu.memory_space<vmem>>, %arg4: memref<128x128xbf16, #tpu.memory_space<vmem>>, %arg5: memref<8x128xf32, #tpu.memory_space<vmem>>, %arg6: memref<8x128xbf16, #tpu.memory_space<vmem>>) attributes {dimension_semantics = [], scalar_prefetch = 0 : i64, scratch_operands = 0 : i64, tpu.core_type = #tpu.core_type<tc>} {
    %c0 = arith.constant 0 : index
    %c0_0 = arith.constant 0 : index
    %0 = vector.load %arg5[%c0, %c0_0] : memref<8x128xf32, #tpu.memory_space<vmem>>, vector<1x128xf32>
    %c1 = arith.constant 1 : index
    %c0_1 = arith.constant 0 : index
    %1 = vector.load %arg5[%c1, %c0_1] : memref<8x128xf32, #tpu.memory_space<vmem>>, vector<1x128xf32>
    %c0_2 = arith.constant 0 : index
    %c0_3 = arith.constant 0 : index
    %2 = vector.load %arg0[%c0_2, %c0_3] : memref<8x10xf32, #tpu.memory_space<vmem>>, vector<8x10xf32>
    %3 = arith.truncf %2 : vector<8x10xf32> to vector<8x10xbf16>
    %c0_4 = arith.constant 0 : index
    %c0_5 = arith.constant 0 : index
    %4 = vector.load %arg2[%c0_4, %c0_5] : memref<10x128xbf16, #tpu.memory_space<vmem>>, vector<10x128xbf16>
    %cst = arith.constant dense<0.000000e+00> : vector<8x128xf32>
    %5 = tpu.matmul %3, %4, %cst {dimension_numbers = #tpu.dot_dimension_numbers<[1], [0], [0], [1], [0, 0, 1, 1], [], []>} : vector<8x10xbf16>, vector<10x128xbf16>, vector<8x128xf32> -> vector<8x128xf32>
    %c0_6 = arith.constant 0 : index
    %c0_7 = arith.constant 0 : index
    %6 = vector.load %arg1[%c0_6, %c0_7] : memref<8x100xf32, #tpu.memory_space<vmem>>, vector<8x100xf32>
    %7 = arith.truncf %6 : vector<8x100xf32> to vector<8x100xbf16>
    %c0_8 = arith.constant 0 : index
    %c0_9 = arith.constant 0 : index
    %8 = vector.load %arg3[%c0_8, %c0_9] : memref<100x128xbf16, #tpu.memory_space<vmem>>, vector<100x128xbf16>
    %cst_10 = arith.constant dense<0.000000e+00> : vector<8x128xf32>
    %9 = tpu.matmul %7, %8, %cst_10 {dimension_numbers = #tpu.dot_dimension_numbers<[1], [0], [0], [1], [0, 0, 1, 1], [], []>} : vector<8x100xbf16>, vector<100x128xbf16>, vector<8x128xf32> -> vector<8x128xf32>
    %10 = arith.addf %5, %9 : vector<8x128xf32>
    %11 = vector.broadcast %0 : vector<1x128xf32> to vector<8x128xf32>
    %12 = arith.addf %10, %11 : vector<8x128xf32>
    %cst_11 = arith.constant 0.000000e+00 : f32
    %13 = vector.broadcast %cst_11 : f32 to vector<8x128xf32>
    %14 = arith.maximumf %12, %13 : vector<8x128xf32>
    %15 = arith.truncf %14 : vector<8x128xf32> to vector<8x128xbf16>
    %c0_12 = arith.constant 0 : index
    %c0_13 = arith.constant 0 : index
    %16 = vector.load %arg4[%c0_12, %c0_13] : memref<128x128xbf16, #tpu.memory_space<vmem>>, vector<128x128xbf16>
    %cst_14 = arith.constant dense<0.000000e+00> : vector<8x128xf32>
    %17 = tpu.matmul %15, %16, %cst_14 {dimension_numbers = #tpu.dot_dimension_numbers<[1], [0], [0], [1], [0, 0, 1, 1], [], []>} : vector<8x128xbf16>, vector<128x128xbf16>, vector<8x128xf32> -> vector<8x128xf32>
    %18 = vector.broadcast %1 : vector<1x128xf32> to vector<8x128xf32>
    %19 = arith.addf %17, %18 : vector<8x128xf32>
    %20 = arith.negf %19 : vector<8x128xf32>
    %21 = math.exp %20 : vector<8x128xf32>
    %cst_15 = arith.constant 1.000000e+00 : f32
    %22 = vector.broadcast %cst_15 : f32 to vector<8x128xf32>
    %23 = arith.addf %22, %21 : vector<8x128xf32>
    %24 = arith.divf %22, %23 : vector<8x128xf32>
    %25 = arith.truncf %24 : vector<8x128xf32> to vector<8x128xbf16>
    %c0_16 = arith.constant 0 : index
    %c0_17 = arith.constant 0 : index
    %26 = vector.load %arg6[%c0_16, %c0_17] : memref<8x128xbf16, #tpu.memory_space<vmem>>, vector<8x128xbf16>
    tpu.vector_store %arg6[%c0_16, %c0_17], %25 {strides = array<i32>} : memref<8x128xbf16, #tpu.memory_space<vmem>>, vector<8x128xbf16>,
    return
  }
}

</mosaic_0001>

<llo_original>
// kernel: tpu_custom_call.1
$region0: #{tpu_custom_call.1}
  #allocation0 [shape = 'u32[]', space=smem, size = 0x4, offset = 0x4, fixed_abs, tag = 'smem constant byte address 0x4 - core index']
  #allocation1 [shape = 'u32[144,128]{1,0:T(1,128)}', space=vmem, size = 0x12000, scoped, tag = 'internal scratch']
  %s0 = inlined_call_operand.hbm [shape: f32[8,10], index: 0, kind: input, shape index: {}]
  %s1 = inlined_call_operand.hbm [shape: f32[8,100], index: 1, kind: input, shape index: {}]
  %s2 = inlined_call_operand.hbm [shape: bf16[10,128], index: 2, kind: input, shape index: {}]
  %s3 = inlined_call_operand.hbm [shape: bf16[100,128], index: 3, kind: input, shape index: {}]
  %s4 = inlined_call_operand.hbm [shape: bf16[128,128], index: 4, kind: input, shape index: {}]
  %s5 = inlined_call_operand.vmem [shape: f32[8,128], index: 5, kind: input, shape index: {}]
  %s6 = inlined_call_operand.hbm [shape: bf16[8,128], index: 6, kind: output, shape index: {}]
  %s7 = sld [smem:[#allocation0]]
  $region54: #{tpu_custom_call.1} parent=0
    _
  %s9 = ssub.s32 1, %s7
  %s10 = scalar_select 0, %s9, %s7
  $region1: #{tpu_custom_call.1} parent=0
    #allocation2 [shape = 'u8[4096]{0}', space=vmem, size = 0x1000, scoped, tag = 'input window, operand 0, single buffered']
    #allocation3 [shape = 's32[1]{0}', space=sflag, size = 0x4, scoped, tag = 'scoped memory for tpu_custom_call.1']
    #allocation4 [shape = 's32[1]{0}', space=sflag, size = 0x4, scoped, tag = 'scoped memory for tpu_custom_call.1']
    #allocation5 [shape = 'u8[4096]{0}', space=vmem, size = 0x1000, scoped, tag = 'input window, operand 1, single buffered']
    #allocation6 [shape = 's32[1]{0}', space=sflag, size = 0x4, scoped, tag = 'scoped memory for tpu_custom_call.1']
    #allocation7 [shape = 'u8[4096]{0}', space=vmem, size = 0x1000, scoped, tag = 'input window, operand 2, single buffered']
    #allocation8 [shape = 'u8[26624]{0}', space=vmem, size = 0x6800, scoped, tag = 'input window, operand 3, single buffered']
    #allocation9 [shape = 's32[1]{0}', space=sflag, size = 0x4, scoped, tag = 'scoped memory for tpu_custom_call.1']
    #allocation10 [shape = 'u8[32768]{0}', space=vmem, size = 0x8000, scoped, tag = 'input window, operand 4, single buffered']
    #allocation11 [shape = 'u8[2048]{0}', space=vmem, size = 0x800, scoped, tag = 'output window, operand 0, single buffered']
    %11 = vsyncpa [#allocation3], 0
    %12 = vsyncpa [#allocation6], 0
    %13 = vsyncpa [#allocation9], 0
    %14 = vsyncpa [#allocation4], 0
    // Predicated region
    $region2: #{tpu_custom_call.1} parent=1 // pred_check
      _
    $region3: #{tpu_custom_call.1} parent=1 // pred_check_branch
      %16 = sbr.rel (0) target = $region5
    $region4: #{tpu_custom_call.1} parent=1 // pred_region
      %s18 = ssub.s32 128, 128
      %19 = vsyncadd [#allocation3], %s18
      %s21 = sshll.u32 [#allocation2], 4
      %s22 = int_to_ptr.vmem [resolvable:$true] %s21
      %24 = dma.hbm_to_vmem [thread:$0]  %s0, 128, %s22, [#allocation3]
    $region5: #{tpu_custom_call.1} parent=1 // pred_fallthru
      _
    // Predicated region
    $region6: #{tpu_custom_call.1} parent=1 // pred_check
      _
    $region7: #{tpu_custom_call.1} parent=1 // pred_check_branch
      %26 = sbr.rel (0) target = $region9
    $region8: #{tpu_custom_call.1} parent=1 // pred_region
      %s28 = ssub.s32 128, 128
      %29 = vsyncadd [#allocation6], %s28
      %s31 = sshll.u32 [#allocation5], 4
      %s32 = int_to_ptr.vmem [resolvable:$true] %s31
      %34 = dma.hbm_to_vmem [thread:$0]  %s1, 128, %s32, [#allocation6]
    $region9: #{tpu_custom_call.1} parent=1 // pred_fallthru
      _
    // Predicated region
    $region10: #{tpu_custom_call.1} parent=1 // pred_check
      _
    $region11: #{tpu_custom_call.1} parent=1 // pred_check_branch
      %36 = sbr.rel (0) target = $region13
    $region12: #{tpu_custom_call.1} parent=1 // pred_region
      %s38 = ssub.s32 128, 128
      %39 = vsyncadd [#allocation6], %s38
      %s40 = sshll.u32 [#allocation7], 4
      %s41 = int_to_ptr.vmem [resolvable:$true] %s40
      %46 = dma.hbm_to_vmem [thread:$0]  %s2, 128, %s41, [#allocation6], 64, 64, 4
    $region13: #{tpu_custom_call.1} parent=1 // pred_fallthru
      _
    // Predicated region
    $region14: #{tpu_custom_call.1} parent=1 // pred_check
      _
    $region15: #{tpu_custom_call.1} parent=1 // pred_check_branch
      %48 = sbr.rel (0) target = $region17
    $region16: #{tpu_custom_call.1} parent=1 // pred_region
      %s50 = ssub.s32 832, 832
      %51 = vsyncadd [#allocation9], %s50
      %s52 = sshll.u32 [#allocation8], 4
      %s53 = int_to_ptr.vmem [resolvable:$true] %s52
      %58 = dma.hbm_to_vmem [thread:$0]  %s3, 832, %s53, [#allocation9], 64, 64, 4
    $region17: #{tpu_custom_call.1} parent=1 // pred_fallthru
      _
    // Predicated region
    $region18: #{tpu_custom_call.1} parent=1 // pred_check
      _
    $region19: #{tpu_custom_call.1} parent=1 // pred_check_branch
      %60 = sbr.rel (0) target = $region21
    $region20: #{tpu_custom_call.1} parent=1 // pred_region
      %s62 = ssub.s32 1024, 1024
      %63 = vsyncadd [#allocation9], %s62
      %s64 = sshll.u32 [#allocation10], 4
      %s65 = int_to_ptr.vmem [resolvable:$true] %s64
      %70 = dma.hbm_to_vmem [thread:$0]  %s4, 1024, %s65, [#allocation9], 64, 64, 4
    $region21: #{tpu_custom_call.1} parent=1 // pred_fallthru
      _
    // Predicated region
    $region22: #{tpu_custom_call.1} parent=1 // pred_check
      _
    $region23: #{tpu_custom_call.1} parent=1 // pred_check_branch
      %72 = sbr.rel (0) target = $region25
    $region24: #{tpu_custom_call.1} parent=1 // pred_region
      _
    $region25: #{tpu_custom_call.1} parent=1 // pred_fallthru
      _
    // Predicated region
    $region26: #{tpu_custom_call.1} parent=1 // pred_check
      _
    $region27: #{tpu_custom_call.1} parent=1 // pred_check_branch
      %74 = sbr.rel (0) target = $region29
    $region28: #{tpu_custom_call.1} parent=1 // pred_region
      %75 = dma.done [#allocation3], 128
    $region29: #{tpu_custom_call.1} parent=1 // pred_fallthru
      _
    // Predicated region
    $region30: #{tpu_custom_call.1} parent=1 // pred_check
      _
    $region31: #{tpu_custom_call.1} parent=1 // pred_check_branch
      %77 = sbr.rel (0) target = $region33
    $region32: #{tpu_custom_call.1} parent=1 // pred_region
      %78 = dma.done [#allocation6], 128
    $region33: #{tpu_custom_call.1} parent=1 // pred_fallthru
      _
    // Predicated region
    $region34: #{tpu_custom_call.1} parent=1 // pred_check
      _
    $region35: #{tpu_custom_call.1} parent=1 // pred_check_branch
      %80 = sbr.rel (0) target = $region37
    $region36: #{tpu_custom_call.1} parent=1 // pred_region
      %81 = dma.done [#allocation6], 128
    $region37: #{tpu_custom_call.1} parent=1 // pred_fallthru
      _
    // Predicated region
    $region38: #{tpu_custom_call.1} parent=1 // pred_check
      _
    $region39: #{tpu_custom_call.1} parent=1 // pred_check_branch
      %83 = sbr.rel (0) target = $region41
    $region40: #{tpu_custom_call.1} parent=1 // pred_region
      %84 = dma.done [#allocation9], 832
    $region41: #{tpu_custom_call.1} parent=1 // pred_fallthru
      _
    // Predicated region
    $region42: #{tpu_custom_call.1} parent=1 // pred_check
      _
    $region43: #{tpu_custom_call.1} parent=1 // pred_check_branch
      %86 = sbr.rel (0) target = $region45
    $region44: #{tpu_custom_call.1} parent=1 // pred_region
      %87 = dma.done [#allocation9], 1024
    $region45: #{tpu_custom_call.1} parent=1 // pred_fallthru
      _
    %v89 = vld [vmem:[%s5] sm:$0x1]
    %v90 = vld [vmem:[%s5 + $0x1] sm:$0x1]
    %v91 = vld [vmem:[#allocation2] sm:$0xff]
    %v92 = vpack.c.bf16 %v91, %v91
    %v93 = vld [vmem:[#allocation7] sm:$0xf]
    %v94 = vld [vmem:[#allocation7 + $0x4] sm:$0x1]
    %v95 = vld [vmem:[#allocation5] sm:$0xff]
    %v96 = vpack.c.bf16 %v95, %v95
    %v97 = vld [vmem:[#allocation8] sm:$0xf]
    %v98 = vld [vmem:[#allocation8 + $0x4] sm:$0xf]
    %v99 = vld [vmem:[#allocation8 + $0x8] sm:$0xf]
    %v100 = vld [vmem:[#allocation8 + $0xc] sm:$0xf]
    %v101 = vld [vmem:[#allocation8 + $0x10] sm:$0xf]
    %v102 = vld [vmem:[#allocation8 + $0x14] sm:$0xf]
    %v103 = vld [vmem:[#allocation8 + $0x18] sm:$0xf]
    %v104 = vld [vmem:[#allocation8 + $0x1c] sm:$0xf]
    %v105 = vld [vmem:[#allocation8 + $0x20] sm:$0xf]
    %v106 = vld [vmem:[#allocation8 + $0x24] sm:$0xf]
    %v107 = vld [vmem:[#allocation8 + $0x28] sm:$0xf]
    %v108 = vld [vmem:[#allocation8 + $0x2c] sm:$0xf]
    %v109 = vld [vmem:[#allocation8 + $0x30] sm:$0x3]
    %v123 = vunpack.c.l.b16 %v97
    %v124 = vunpack.c.l.b16 %v98
    %v125 = vunpack.c.l.b16 %v99
    %v126 = vunpack.c.l.b16 %v100
    %v127 = vunpack.c.l.b16 %v101
    %v128 = vunpack.c.l.b16 %v102
    %v129 = vunpack.c.l.b16 %v103
    %v130 = vunpack.c.l.b16 %v104
    %v131 = vunpack.c.l.b16 %v105
    %v132 = vunpack.c.l.b16 %v106
    %v133 = vunpack.c.l.b16 %v107
    %v134 = vunpack.c.l.b16 %v108
    %v135 = vunpack.c.l.b16 %v109
    %v136 = vpack.c.b16 %v124, %v123
    %v137 = vpack.c.b16 %v126, %v125
    %v138 = vpack.c.b16 %v128, %v127
    %v139 = vpack.c.b16 %v130, %v129
    %v140 = vpack.c.b16 %v132, %v131
    %v141 = vpack.c.b16 %v134, %v133
    %v142 = vpack.c.b16 %v135, %v135
    %vm149 = vcmask 818176
    %v151 = vsel %vm149, %v96, 0
    %vm153 = vcmask 1041408
    %v155 = vsel %vm153, %v142, 0
    %157 = vmatprep.subr.bf16.mxu0 0
    %158 = vmatpush1.bf16.msra.mxu0 %v136
    %159 = vmatprep.subr.bf16.mxu0 0
    %160 = vmatpush1.bf16.msra.mxu0 %v137
    %161 = vmatprep.subr.bf16.mxu0 0
    %162 = vmatpush1.bf16.msra.mxu0 %v138
    %163 = vmatprep.subr.bf16.mxu0 0
    %164 = vmatpush1.bf16.msra.mxu0 %v139
    %165 = vmatprep.subr.bf16.mxu0 0
    %166 = vmatpush1.bf16.msra.mxu0 %v140
    %167 = vmatprep.subr.bf16.mxu0 0
    %168 = vmatpush1.bf16.msra.mxu0 %v141
    %169 = vmatprep.subr.bf16.mxu0 0
    %170 = vmatpush1.bf16.msra.mxu0 %v155
    %171 = vmatprep.subr.bf16.mxu0 0
    %172 = vmatpush1.bf16.msra.mxu0 0
    %173 = vmatprep.subr.bf16.mxu0 0
    %174 = vmatpush1.bf16.msra.mxu0 0
    %175 = vmatprep.subr.bf16.mxu0 0
    %176 = vmatpush1.bf16.msra.mxu0 0
    %177 = vmatprep.subr.bf16.mxu0 0
    %178 = vmatpush1.bf16.msra.mxu0 0
    %179 = vmatprep.subr.bf16.mxu0 0
    %180 = vmatpush1.bf16.msra.mxu0 0
    %181 = vmatprep.subr.bf16.mxu0 0
    %182 = vmatpush1.bf16.msra.mxu0 0
    %183 = vmatprep.subr.bf16.mxu0 0
    %184 = vmatpush1.bf16.msra.mxu0 0
    %185 = vmatprep.subr.bf16.mxu0 0
    %186 = vmatpush1.bf16.msra.mxu0 0
    %187 = vmatprep.subr.bf16.mxu0 0
    %188 = vmatpush1.bf16.msra.mxu0 0
    %189 = vmatprep.mubr.bf16.mxu0 0
    %190 = vmatmul.mubr.bf16.gmra.mrb[0].mxu0 %v151
    %v191 = vpop.f32.mrb[0].mxu0
    %v192 = vadd.f32 0.0, %v191
    %v193 = vpop.f32.mrb[0].mxu0
    %v194 = vpop.f32.mrb[0].mxu0
    %v195 = vpop.f32.mrb[0].mxu0
    %196 = vdwg.mxu0
    %v199 = vunpack.c.l.b16 %v93
    %v200 = vunpack.c.l.b16 %v94
    %v201 = vpack.c.b16 %v200, %v199
    %vm202 = vcmask 80896
    %v204 = vsel %vm202, %v92, 0
    %vm206 = vcmask 1044480
    %v208 = vsel %vm206, %v201, 0
    %210 = vmatprep.subr.bf16.mxu0 0
    %211 = vmatpush1.bf16.msra.mxu0 %v208
    %212 = vmatprep.subr.bf16.mxu0 0
    %213 = vmatpush1.bf16.msra.mxu0 0
    %214 = vmatprep.subr.bf16.mxu0 0
    %215 = vmatpush1.bf16.msra.mxu0 0
    %216 = vmatprep.subr.bf16.mxu0 0
    %217 = vmatpush1.bf16.msra.mxu0 0
    %218 = vmatprep.subr.bf16.mxu0 0
    %219 = vmatpush1.bf16.msra.mxu0 0
    %220 = vmatprep.subr.bf16.mxu0 0
    %221 = vmatpush1.bf16.msra.mxu0 0
    %222 = vmatprep.subr.bf16.mxu0 0
    %223 = vmatpush1.bf16.msra.mxu0 0
    %224 = vmatprep.subr.bf16.mxu0 0
    %225 = vmatpush1.bf16.msra.mxu0 0
    %226 = vmatprep.subr.bf16.mxu0 0
    %227 = vmatpush1.bf16.msra.mxu0 0
    %228 = vmatprep.subr.bf16.mxu0 0
    %229 = vmatpush1.bf16.msra.mxu0 0
    %230 = vmatprep.subr.bf16.mxu0 0
    %231 = vmatpush1.bf16.msra.mxu0 0
    %232 = vmatprep.subr.bf16.mxu0 0
    %233 = vmatpush1.bf16.msra.mxu0 0
    %234 = vmatprep.subr.bf16.mxu0 0
    %235 = vmatpush1.bf16.msra.mxu0 0
    %236 = vmatprep.subr.bf16.mxu0 0
    %237 = vmatpush1.bf16.msra.mxu0 0
    %238 = vmatprep.subr.bf16.mxu0 0
    %239 = vmatpush1.bf16.msra.mxu0 0
    %240 = vmatprep.subr.bf16.mxu0 0
    %241 = vmatpush1.bf16.msra.mxu0 0
    %242 = vmatprep.mubr.bf16.mxu0 0
    %243 = vmatmul.mubr.bf16.gmra.mrb[0].mxu0 %v204
    %v244 = vpop.f32.mrb[0].mxu0
    %v245 = vadd.f32 %v192, %v244
    %v246 = vpop.f32.mrb[0].mxu0
    %v247 = vpop.f32.mrb[0].mxu0
    %v248 = vpop.f32.mrb[0].mxu0
    %249 = vdwg.mxu0
    %v250 = vlaneseq
    %v251 = vshrl.u32 %v250, 7
    %v252 = vsub.s32 0, %v251
    %v253 = vrot.slane %v89, %v252
    %v254 = vadd.f32 %v245, %v253
    %v255 = vmax.f32 %v254, 0.0
    %v256 = vpack.c.bf16 %v255, %v255
    %v257 = vld [vmem:[#allocation10] sm:$0xf]
    %v258 = vld [vmem:[#allocation10 + $0x4] sm:$0xf]
    %v259 = vld [vmem:[#allocation10 + $0x8] sm:$0xf]
    %v260 = vld [vmem:[#allocation10 + $0xc] sm:$0xf]
    %v261 = vld [vmem:[#allocation10 + $0x10] sm:$0xf]
    %v262 = vld [vmem:[#allocation10 + $0x14] sm:$0xf]
    %v263 = vld [vmem:[#allocation10 + $0x18] sm:$0xf]
    %v264 = vld [vmem:[#allocation10 + $0x1c] sm:$0xf]
    %v265 = vld [vmem:[#allocation10 + $0x20] sm:$0xf]
    %v266 = vld [vmem:[#allocation10 + $0x24] sm:$0xf]
    %v267 = vld [vmem:[#allocation10 + $0x28] sm:$0xf]
    %v268 = vld [vmem:[#allocation10 + $0x2c] sm:$0xf]
    %v269 = vld [vmem:[#allocation10 + $0x30] sm:$0xf]
    %v270 = vld [vmem:[#allocation10 + $0x34] sm:$0xf]
    %v271 = vld [vmem:[#allocation10 + $0x38] sm:$0xf]
    %v272 = vld [vmem:[#allocation10 + $0x3c] sm:$0xf]
    %v273 = vlaneseq
    %v274 = vshrl.u32 %v273, 7
    %v275 = vsub.s32 0, %v274
    %v276 = vrot.slane %v90, %v275
    %v293 = vunpack.c.l.b16 %v257
    %v294 = vunpack.c.l.b16 %v258
    %v295 = vunpack.c.l.b16 %v259
    %v296 = vunpack.c.l.b16 %v260
    %v297 = vunpack.c.l.b16 %v261
    %v298 = vunpack.c.l.b16 %v262
    %v299 = vunpack.c.l.b16 %v263
    %v300 = vunpack.c.l.b16 %v264
    %v301 = vunpack.c.l.b16 %v265
    %v302 = vunpack.c.l.b16 %v266
    %v303 = vunpack.c.l.b16 %v267
    %v304 = vunpack.c.l.b16 %v268
    %v305 = vunpack.c.l.b16 %v269
    %v306 = vunpack.c.l.b16 %v270
    %v307 = vunpack.c.l.b16 %v271
    %v308 = vunpack.c.l.b16 %v272
    %v309 = vpack.c.b16 %v294, %v293
    %v310 = vpack.c.b16 %v296, %v295
    %v311 = vpack.c.b16 %v298, %v297
    %v312 = vpack.c.b16 %v300, %v299
    %v313 = vpack.c.b16 %v302, %v301
    %v314 = vpack.c.b16 %v304, %v303
    %v315 = vpack.c.b16 %v306, %v305
    %v316 = vpack.c.b16 %v308, %v307
    %325 = vmatprep.subr.bf16.mxu0 0
    %326 = vmatpush1.bf16.msra.mxu0 %v309
    %327 = vmatprep.subr.bf16.mxu0 0
    %328 = vmatpush1.bf16.msra.mxu0 %v310
    %329 = vmatprep.subr.bf16.mxu0 0
    %330 = vmatpush1.bf16.msra.mxu0 %v311
    %331 = vmatprep.subr.bf16.mxu0 0
    %332 = vmatpush1.bf16.msra.mxu0 %v312
    %333 = vmatprep.subr.bf16.mxu0 0
    %334 = vmatpush1.bf16.msra.mxu0 %v313
    %335 = vmatprep.subr.bf16.mxu0 0
    %336 = vmatpush1.bf16.msra.mxu0 %v314
    %337 = vmatprep.subr.bf16.mxu0 0
    %338 = vmatpush1.bf16.msra.mxu0 %v315
    %339 = vmatprep.subr.bf16.mxu0 0
    %340 = vmatpush1.bf16.msra.mxu0 %v316
    %341 = vmatprep.subr.bf16.mxu0 0
    %342 = vmatpush1.bf16.msra.mxu0 0
    %343 = vmatprep.subr.bf16.mxu0 0
    %344 = vmatpush1.bf16.msra.mxu0 0
    %345 = vmatprep.subr.bf16.mxu0 0
    %346 = vmatpush1.bf16.msra.mxu0 0
    %347 = vmatprep.subr.bf16.mxu0 0
    %348 = vmatpush1.bf16.msra.mxu0 0
    %349 = vmatprep.subr.bf16.mxu0 0
    %350 = vmatpush1.bf16.msra.mxu0 0
    %351 = vmatprep.subr.bf16.mxu0 0
    %352 = vmatpush1.bf16.msra.mxu0 0
    %353 = vmatprep.subr.bf16.mxu0 0
    %354 = vmatpush1.bf16.msra.mxu0 0
    %355 = vmatprep.subr.bf16.mxu0 0
    %356 = vmatpush1.bf16.msra.mxu0 0
    %357 = vmatprep.mubr.bf16.mxu0 0
    %358 = vmatmul.mubr.bf16.gmra.mrb[0].mxu0 %v256
    %v359 = vpop.f32.mrb[0].mxu0
    %v360 = vadd.f32 %v276, %v359
    %v361 = vpop.f32.mrb[0].mxu0
    %v362 = vpop.f32.mrb[0].mxu0
    %v363 = vpop.f32.mrb[0].mxu0
    %364 = vdwg.mxu0
    %v365 = vxor.u32 %v360, 2147483648
    %v366 = vmul.f32 %v365, 1.442695
    %v367 = vpow.pop %v366
    %v368 = vadd.f32 %v367, 1.0
    %v369 = vrcp.pop %v368
    %v370 = vmul.f32 1.0, %v369
    %v371 = vpack.c.bf16 %v370, %v370
    %372 = vst [vmem:[#allocation11] sm:$0xf] %v371
    // Predicated region
    $region46: #{tpu_custom_call.1} parent=1 // pred_check
      _
    $region47: #{tpu_custom_call.1} parent=1 // pred_check_branch
      %374 = sbr.rel (0) target = $region49
    $region48: #{tpu_custom_call.1} parent=1 // pred_region
      %s376 = ssub.s32 64, 64
      %377 = vsyncadd [#allocation4], %s376
      %s379 = sshll.u32 [#allocation11], 4
      %s380 = int_to_ptr.vmem [resolvable:$true] %s379
      %382 = dma.vmem_to_hbm [thread:$0]  %s380, 64, %s6, [#allocation4]
    $region49: #{tpu_custom_call.1} parent=1 // pred_fallthru
      _
    // Predicated region
    $region50: #{tpu_custom_call.1} parent=1 // pred_check
      _
    $region51: #{tpu_custom_call.1} parent=1 // pred_check_branch
      %384 = sbr.rel (0) target = $region53
    $region52: #{tpu_custom_call.1} parent=1 // pred_region
      %385 = dma.done [#allocation4], 64
    $region53: #{tpu_custom_call.1} parent=1 // pred_fallthru
      _
    %386 = vsyncpa [#allocation3], 1
    %387 = vsyncpa [#allocation6], 1
    %388 = vsyncpa [#allocation9], 1
    %389 = vsyncpa [#allocation4], 1

</llo_original>
